<compile_context>
chip_gen: v7x
topology: tpu7x:2x2x1
jax: 0.10.0
libtpu: 0.0.40
codegen_flags: <defaults>
</compile_context>

<pallas_src>
import functools
import math

import jax
import jax.numpy as jnp
from jax.experimental import pallas as pl
from jax.experimental.pallas import tpu as pltpu

_MIN_SPLIT_BYTES = 256 << 10     # below this, a single block is fine (tiny inputs)
_MIN_GRID_STEPS = 4              # >= 4 steps when split: both v7x TCs keep pipelining


def _build_pe(max_len: int, dim: int) -> jnp.ndarray:
    """Sinusoidal positional encoding table, shape (max_len, 1, dim), float32."""
    position = jnp.arange(0, max_len, dtype=jnp.float32)[:, None]            # (L, 1)
    div_term = jnp.exp(
        jnp.arange(0, dim, 2, dtype=jnp.float32) * -(math.log(10000.0) / dim)
    )                                                                          # (ceil(D/2),)
    angles = position * div_term                                               # (L, ceil(D/2))
    pe = jnp.zeros((max_len, dim), dtype=jnp.float32)
    pe = pe.at[:, 0::2].set(jnp.sin(angles))
    pe = pe.at[:, 1::2].set(jnp.cos(angles[:, : dim // 2]))                    # odd-D safe
    return pe[:, None, :]                                                      # (L, 1, D)


def _vmem_capacity_bytes() -> int:
    """Best-effort VMEM capacity query; conservative v7x-class fallback."""
    try:
        info = pltpu.get_tpu_info()
        for attr in ("vmem_capacity_bytes", "vmem_capacity", "vmem_size_bytes"):
            v = getattr(info, attr, None)
            if v:
                return int(v)
    except Exception:
        pass
    return 64 << 20


def _select_budget() -> tuple[int, int]:
    """Generation-aware (block_target_bytes, vmem_limit_bytes)."""
    vmem = _vmem_capacity_bytes()
    if vmem <= (64 << 20):
        # v7x-class: 64 MiB VMEM per TensorCore -> ~3 MiB blocks, ~48 MiB limit.
        return 3 << 20, 48 << 20
    # v5e/v6e: 128 MiB physical VMEM -> ~6 MiB blocks, 64 MiB scoped limit.
    return 6 << 20, 64 << 20


def _sublane_pack(dtype) -> int:
    """Dtype-native sublane packing: 8 for 32-bit, 16 for 16-bit, 32 for 8-bit."""
    return max(8, 256 // (jnp.dtype(dtype).itemsize * 8))


def _choose_tile(length: int, row_bytes: int, target_bytes: int, align: int) -> int:
    """Largest tile along an axis s.t. the block is <= target_bytes, with at least
    _MIN_GRID_STEPS steps whenever the axis is split, aligned to `align` rows."""
    total = length * row_bytes
    if total <= _MIN_SPLIT_BYTES:
        return length                      # tiny array: one block, no split
    tile = max(1, target_bytes // max(row_bytes, 1))
    tile = min(tile, -(-length // _MIN_GRID_STEPS))   # ceil(length / MIN_STEPS)
    if align > 1:
        tile = max(align, (tile // align) * align)
    return min(tile, length)


def _pos_enc_kernel_3d(emb_ref, pe_ref, out_ref, *, scale):
    # emb/out: (tile_s, tile_b, D) ; pe: (tile_s, 1, D) broadcasts over the
    # batch (sublane) axis — no materialized tile, no extra VMEM.
    out_ref[...] = (emb_ref[...] * scale + pe_ref[...]).astype(out_ref.dtype)


def _pos_enc_kernel_flat(emb_ref, pe_ref, out_ref, *, scale, batch):
    # emb/out: (tile_s, B*D) ; pe: (tile_s, D).  Only used when D is not a
    # multiple of 128, so fusing B*D keeps the output stores lane-dense.
    pe = jnp.tile(pe_ref[...], (1, batch))
    out_ref[...] = (emb_ref[...] * scale + pe).astype(out_ref.dtype)


def positional_encoding_forward(emb: jnp.ndarray, pe: jnp.ndarray) -> jnp.ndarray:
    """emb: (S, B, D), pe: (max_len, 1, D) -> emb * sqrt(D) + pe[:S]."""
    S, B, D = emb.shape
    scale = math.sqrt(D)
    dtype = emb.dtype
    itemsize = jnp.dtype(dtype).itemsize
    pack = _sublane_pack(dtype)
    target_block, vmem_limit = _select_budget()

    # Slice before casting: never cast the full max_len table per call.
    pe_s = pe[:S].astype(dtype)                                # (S, 1, D)

    lane_dense = (D % 128 == 0)
    row_bytes = B * D * itemsize                               # one seq row, full batch

    if not lane_dense and row_bytes <= target_block:
        # --- Flat path: D not lane-dense; fuse (B, D) -> B*D lanes, tile over S ---
        F = B * D
        emb2 = emb.reshape(S, F)
        pe2 = pe_s[:, 0, :]                                    # (S, D)
        tile_s = _choose_tile(S, row_bytes, target_block, align=pack)
        grid = (pl.cdiv(S, tile_s),)
        out2 = pl.pallas_call(
            functools.partial(_pos_enc_kernel_flat, scale=scale, batch=B),
            out_shape=jax.ShapeDtypeStruct((S, F), dtype),
            grid_spec=pltpu.PrefetchScalarGridSpec(
                num_scalar_prefetch=0,
                grid=grid,
                in_specs=[
                    pl.BlockSpec((tile_s, F), lambda i: (i, 0)),
                    pl.BlockSpec((tile_s, D), lambda i: (i, 0)),
                ],
                out_specs=pl.BlockSpec((tile_s, F), lambda i: (i, 0)),
            ),
            compiler_params=pltpu.CompilerParams(
                dimension_semantics=("parallel",),
                vmem_limit_bytes=vmem_limit,
            ),
        )(emb2, pe2)
        return out2.reshape(S, B, D)

    # --- 3-D path: blocks (tile_s, tile_b, D); pe (tile_s, 1, D) broadcasts ---
    chunk_bytes = D * itemsize
    if row_bytes <= target_block:
        tile_b = B
    else:
        tile_b = max(1, target_block // max(chunk_bytes, 1))
        if tile_b >= B:
            tile_b = B
        else:
            tile_b = min(B, max(pack, (tile_b // pack) * pack))
    block_row_bytes = tile_b * chunk_bytes
    tile_s = _choose_tile(S, block_row_bytes, target_block, align=1)
    grid = (pl.cdiv(S, tile_s), pl.cdiv(B, tile_b))
    out = pl.pallas_call(
        functools.partial(_pos_enc_kernel_3d, scale=scale),
        out_shape=jax.ShapeDtypeStruct((S, B, D), dtype),
        grid_spec=pltpu.PrefetchScalarGridSpec(
            num_scalar_prefetch=0,
            grid=grid,
            in_specs=[
                pl.BlockSpec((tile_s, tile_b, D), lambda s, b: (s, b, 0)),
                pl.BlockSpec((tile_s, 1, D), lambda s, b: (s, 0, 0)),
            ],
            out_specs=pl.BlockSpec((tile_s, tile_b, D), lambda s, b: (s, b, 0)),
        ),
        compiler_params=pltpu.CompilerParams(
            dimension_semantics=("parallel", "parallel"),
            vmem_limit_bytes=vmem_limit,
        ),
    )(emb, pe_s)
    return out


def reference_forward(emb: jnp.ndarray, pe: jnp.ndarray) -> jnp.ndarray:
    S = emb.shape[0]
    D = emb.shape[-1]
    return emb * math.sqrt(D) + pe[:S].astype(emb.dtype)


if __name__ == "__main__":
    # Small shapes consistent with the module: seq=8, batch=2, dim=32.
    S, B, D = 8, 2, 32
    max_len = 64  # module default is 5000; kept small and deterministic here

    key = jax.random.PRNGKey(0)
    emb = jax.random.normal(key, (S, B, D), dtype=jnp.float32)
    pe = _build_pe(max_len, D)

    out = jax.block_until_ready(positional_encoding_forward(emb, pe))
    ref = reference_forward(emb, pe)
    assert out.shape == (S, B, D)
    assert jnp.allclose(out, ref, atol=1e-5, rtol=1e-5), "mismatch vs reference (small)"

    # Lane-dense 3-D path (D % 128 == 0) with multi-block, ragged sequence tiling.
    S2, B2, D2 = 200, 4, 128
    emb2 = jax.random.normal(jax.random.PRNGKey(1), (S2, B2, D2), dtype=jnp.float32)
    pe2 = _build_pe(512, D2)
    out2 = jax.block_until_ready(positional_encoding_forward(emb2, pe2))
    assert jnp.allclose(out2, reference_forward(emb2, pe2), atol=1e-4, rtol=1e-4), \
        "mismatch vs reference (3-D lane-dense)"

    # bf16 flat path (D not a multiple of 128) exercising 16-row sublane packing.
    S3, B3, D3 = 300, 8, 192
    emb3 = jax.random.normal(jax.random.PRNGKey(2), (S3, B3, D3)).astype(jnp.bfloat16)
    pe3 = _build_pe(512, D3)
    out3 = jax.block_until_ready(positional_encoding_forward(emb3, pe3))
    ref3 = reference_forward(emb3, pe3)
    assert jnp.allclose(out3.astype(jnp.float32), ref3.astype(jnp.float32),
                        atol=5e-2, rtol=5e-2), "mismatch vs reference (bf16 flat)"

    print("KERNEL_OK")
</pallas_src>

<mosaic_0001>
module attributes {stable_mosaic.version = 11 : i64} {
  func.func @_pos_enc_kernel_flat(%arg0: i32, %arg1: memref<8x64xf32, #tpu.memory_space<vmem>>, %arg2: memref<8x32xf32, #tpu.memory_space<vmem>>, %arg3: memref<8x64xf32, #tpu.memory_space<vmem>>) attributes {dimension_semantics = [#tpu.dimension_semantics<parallel>], iteration_bounds = array<i64: 1>, scalar_prefetch = 0 : i64, scratch_operands = 0 : i64, tpu.core_type = #tpu.core_type<tc>, window_params = [{transform_indices = @transform_0, window_bounds = array<i64: 8, 64>}, {transform_indices = @transform_1, window_bounds = array<i64: 8, 32>}, {transform_indices = @transform_2, window_bounds = array<i64: 8, 64>}]} {
    %c0 = arith.constant 0 : index
    %c0_0 = arith.constant 0 : index
    %0 = vector.load %arg2[%c0, %c0_0] : memref<8x32xf32, #tpu.memory_space<vmem>>, vector<8x32xf32>
    %1 = tpu.concatenate %0, %0 in 1 : vector<8x32xf32>, vector<8x32xf32> -> vector<8x64xf32>
    %c0_1 = arith.constant 0 : index
    %c0_2 = arith.constant 0 : index
    %2 = vector.load %arg1[%c0_1, %c0_2] : memref<8x64xf32, #tpu.memory_space<vmem>>, vector<8x64xf32>
    %cst = arith.constant 5.65685415 : f32
    %3 = vector.broadcast %cst : f32 to vector<8x64xf32>
    %4 = arith.mulf %2, %3 : vector<8x64xf32>
    %5 = arith.addf %4, %1 : vector<8x64xf32>
    %c0_3 = arith.constant 0 : index
    %c0_4 = arith.constant 0 : index
    %6 = vector.load %arg3[%c0_3, %c0_4] : memref<8x64xf32, #tpu.memory_space<vmem>>, vector<8x64xf32>
    tpu.vector_store %arg3[%c0_3, %c0_4], %5 {strides = array<i32>} : memref<8x64xf32, #tpu.memory_space<vmem>>, vector<8x64xf32>,
    return
  }
  func.func @transform_0(%arg0: i32) -> (i32, i32) {
    %c0_i32 = arith.constant 0 : i32
    %c0_i32_0 = arith.constant 0 : i32
    return %arg0, %c0_i32 : i32, i32
  }
  func.func @transform_1(%arg0: i32) -> (i32, i32) {
    %c0_i32 = arith.constant 0 : i32
    %c0_i32_0 = arith.constant 0 : i32
    return %arg0, %c0_i32 : i32, i32
  }
  func.func @transform_2(%arg0: i32) -> (i32, i32) {
    %c0_i32 = arith.constant 0 : i32
    %c0_i32_0 = arith.constant 0 : i32
    return %arg0, %c0_i32 : i32, i32
  }
}

</mosaic_0001>

<llo_original>
// kernel: tpu_custom_call.1
$region0: #{tpu_custom_call.1}
  #allocation0 [shape = 'u32[]', space=smem, size = 0x4, offset = 0x4, fixed_abs, tag = 'smem constant byte address 0x4 - core index']
  #allocation1 [shape = 'u32[144,128]{1,0:T(1,128)}', space=vmem, size = 0x12000, scoped, tag = 'internal scratch']
  %s0 = inlined_call_operand.hbm [shape: f32[8,64], index: 0, kind: input, shape index: {}]
  %s1 = inlined_call_operand.hbm [shape: f32[8,32], index: 1, kind: input, shape index: {}]
  %s2 = inlined_call_operand.hbm [shape: f32[8,64], index: 2, kind: output, shape index: {}]
  %s3 = sld [smem:[#allocation0]]
  $region26: #{tpu_custom_call.1} parent=0
    _
  %s5 = ssub.s32 1, %s3
  %s6 = scalar_select 0, %s5, %s3
  $region1: #{tpu_custom_call.1} parent=0
    #allocation2 [shape = 'u8[4096]{0}', space=vmem, size = 0x1000, scoped, tag = 'input window, operand 0, single buffered']
    #allocation3 [shape = 's32[1]{0}', space=sflag, size = 0x4, scoped, tag = 'scoped memory for tpu_custom_call.1']
    #allocation4 [shape = 's32[1]{0}', space=sflag, size = 0x4, scoped, tag = 'scoped memory for tpu_custom_call.1']
    #allocation5 [shape = 'u8[4096]{0}', space=vmem, size = 0x1000, scoped, tag = 'input window, operand 1, single buffered']
    #allocation6 [shape = 's32[1]{0}', space=sflag, size = 0x4, scoped, tag = 'scoped memory for tpu_custom_call.1']
    #allocation7 [shape = 'u8[4096]{0}', space=vmem, size = 0x1000, scoped, tag = 'output window, operand 0, single buffered']
    %7 = vsyncpa [#allocation3], 0
    %8 = vsyncpa [#allocation6], 0
    %9 = vsyncpa [#allocation4], 0
    // Predicated region
    $region2: #{tpu_custom_call.1} parent=1 // pred_check
      _
    $region3: #{tpu_custom_call.1} parent=1 // pred_check_branch
      %11 = sbr.rel (0) target = $region5
    $region4: #{tpu_custom_call.1} parent=1 // pred_region
      %s13 = ssub.s32 128, 128
      %14 = vsyncadd [#allocation3], %s13
      %s16 = sshll.u32 [#allocation2], 4
      %s17 = int_to_ptr.vmem [resolvable:$true] %s16
      %19 = dma.hbm_to_vmem [thread:$0]  %s0, 128, %s17, [#allocation3]
    $region5: #{tpu_custom_call.1} parent=1 // pred_fallthru
      _
    // Predicated region
    $region6: #{tpu_custom_call.1} parent=1 // pred_check
      _
    $region7: #{tpu_custom_call.1} parent=1 // pred_check_branch
      %21 = sbr.rel (0) target = $region9
    $region8: #{tpu_custom_call.1} parent=1 // pred_region
      %s23 = ssub.s32 128, 128
      %24 = vsyncadd [#allocation6], %s23
      %s26 = sshll.u32 [#allocation5], 4
      %s27 = int_to_ptr.vmem [resolvable:$true] %s26
      %29 = dma.hbm_to_vmem [thread:$0]  %s1, 128, %s27, [#allocation6]
    $region9: #{tpu_custom_call.1} parent=1 // pred_fallthru
      _
    // Predicated region
    $region10: #{tpu_custom_call.1} parent=1 // pred_check
      _
    $region11: #{tpu_custom_call.1} parent=1 // pred_check_branch
      %31 = sbr.rel (0) target = $region13
    $region12: #{tpu_custom_call.1} parent=1 // pred_region
      %32 = dma.done [#allocation3], 128
    $region13: #{tpu_custom_call.1} parent=1 // pred_fallthru
      _
    // Predicated region
    $region14: #{tpu_custom_call.1} parent=1 // pred_check
      _
    $region15: #{tpu_custom_call.1} parent=1 // pred_check_branch
      %34 = sbr.rel (0) target = $region17
    $region16: #{tpu_custom_call.1} parent=1 // pred_region
      %35 = dma.done [#allocation6], 128
    $region17: #{tpu_custom_call.1} parent=1 // pred_fallthru
      _
    %v36 = vld [vmem:[#allocation5] sm:$0xff]
    %38 = vrot.lane.b32.xlu0 %v36, 32
    %v39 = vpop.permute.xlu0 %38
    %vm41 = vcmask 261120
    %v42 = vsel %vm41, %v36, %v39
    %v43 = vld [vmem:[#allocation2] sm:$0xff]
    %v44 = vmul.f32 %v43, 5.656854
    %v45 = vadd.f32 %v44, %v42
    %vm46 = vcmask 523264
    %47 = vst.msk [vmem:[#allocation7] sm:$0xff] %vm46, %v45
    // Predicated region
    $region18: #{tpu_custom_call.1} parent=1 // pred_check
      _
    $region19: #{tpu_custom_call.1} parent=1 // pred_check_branch
      %49 = sbr.rel (0) target = $region21
    $region20: #{tpu_custom_call.1} parent=1 // pred_region
      %s51 = ssub.s32 128, 128
      %52 = vsyncadd [#allocation4], %s51
      %s54 = sshll.u32 [#allocation7], 4
      %s55 = int_to_ptr.vmem [resolvable:$true] %s54
      %57 = dma.vmem_to_hbm [thread:$0]  %s55, 128, %s2, [#allocation4]
    $region21: #{tpu_custom_call.1} parent=1 // pred_fallthru
      _
    // Predicated region
    $region22: #{tpu_custom_call.1} parent=1 // pred_check
      _
    $region23: #{tpu_custom_call.1} parent=1 // pred_check_branch
      %59 = sbr.rel (0) target = $region25
    $region24: #{tpu_custom_call.1} parent=1 // pred_region
      %60 = dma.done [#allocation4], 128
    $region25: #{tpu_custom_call.1} parent=1 // pred_fallthru
      _
    %61 = vsyncpa [#allocation3], 1
    %62 = vsyncpa [#allocation6], 1
    %63 = vsyncpa [#allocation4], 1

</llo_original>
